<compile_context>
chip_gen: v6e
topology: v6e:2x2x1
jax: 0.10.0
libtpu: 0.0.40
codegen_flags: <defaults>
</compile_context>

<pallas_src>
import jax
import jax.numpy as jnp
from jax.experimental import pallas as pl
from jax.experimental.pallas import tpu as pltpu

HIDDEN = 32          # encoder hidden width
LATENT = 8           # latent width
HP = 128             # hidden padded to lane width
LANE = 128
SUB = 16             # sublane-friendly batch padding (bf16-safe)
MAX_TB = 512         # batch tile upper bound (mem-bound sweet spot per review)


def _round_up(x, m):
    return ((x + m - 1) // m) * m


def ae_forward_kernel(x_ref, we1_ref, wmid_ref, wd2_ref, bhp_ref, bd2_ref, out_ref):
    """Fused AE forward for one batch tile: recon = dec(enc(x)).

    The two middle linear layers are pre-folded into wmid/bmid (exactly linear,
    no nonlinearity between them)."""
    x = x_ref[...].astype(jnp.bfloat16)               # f32 HBM tile -> bf16 in VMEM

    be1 = bhp_ref[0:1, :]                             # [1, HP] f32
    bmid = bhp_ref[1:2, :]                            # [1, HP] f32
    bd2 = bd2_ref[...]                                # [1, DP] f32

    # encoder layer 1 + ReLU
    h = jnp.dot(x, we1_ref[...], preferred_element_type=jnp.float32) + be1
    h = jnp.maximum(h, 0.0)                           # [TB, HP]

    # folded (encoder layer 2 @ decoder layer 1) + ReLU
    g = jnp.dot(h.astype(jnp.bfloat16), wmid_ref[...],
                preferred_element_type=jnp.float32) + bmid
    g = jnp.maximum(g, 0.0)                           # [TB, HP]

    # decoder layer 2
    recon = jnp.dot(g.astype(jnp.bfloat16), wd2_ref[...],
                    preferred_element_type=jnp.float32) + bd2   # [TB, DP]

    out_ref[...] = recon.astype(out_ref.dtype)        # bf16 writeback


def init_params(key, d_in, hidden, latent):
    """PyTorch-Linear-like init (uniform +-1/sqrt(fan_in)); weights stored [in, out]."""
    def linear(k, fan_in, fan_out):
        kw, kb = jax.random.split(k)
        bound = 1.0 / jnp.sqrt(fan_in)
        w = jax.random.uniform(kw, (fan_in, fan_out), jnp.float32, -bound, bound)
        b = jax.random.uniform(kb, (fan_out,), jnp.float32, -bound, bound)
        return w, b

    k1, k2, k3, k4 = jax.random.split(key, 4)
    we1, be1 = linear(k1, d_in, hidden)     # encoder layer 1
    we2, be2 = linear(k2, hidden, latent)   # encoder layer 2
    wd1, bd1 = linear(k3, latent, hidden)   # decoder layer 1
    wd2, bd2 = linear(k4, hidden, d_in)     # decoder layer 2
    return (we1, be1, we2, be2, wd1, bd1, wd2, bd2)


def prepare_params(params, d_in):
    """Fold the two middle layers, zero-pad hidden/feature dims to 128 lanes,
    cast weights to bf16, keep biases f32 in lane-dense buffers."""
    we1, be1, we2, be2, wd1, bd1, wd2, bd2 = params
    dp = _round_up(d_in, LANE)

    # No nonlinearity between encoder L2 and decoder L1 -> compose in f32.
    w_mid = we2 @ wd1                       # [HIDDEN, HIDDEN]
    b_mid = be2 @ wd1 + bd1                 # [HIDDEN]

    def pad2(w, rows, cols):
        out = jnp.zeros((rows, cols), w.dtype)
        return out.at[:w.shape[0], :w.shape[1]].set(w)

    we1_p = pad2(we1, dp, HP).astype(jnp.bfloat16)
    wmid_p = pad2(w_mid, HP, HP).astype(jnp.bfloat16)
    wd2_p = pad2(wd2, HP, dp).astype(jnp.bfloat16)

    bias_hp = jnp.zeros((8, HP), jnp.float32)
    bias_hp = bias_hp.at[0, :be1.shape[0]].set(be1)
    bias_hp = bias_hp.at[1, :b_mid.shape[0]].set(b_mid)
    bd2_p = jnp.zeros((1, dp), jnp.float32).at[0, :bd2.shape[0]].set(bd2)

    return (we1_p, wmid_p, wd2_p, bias_hp, bd2_p)


def _pick_batch_tile(b):
    """Split the batch over >=2 grid steps when possible (shards the 'parallel'
    axis across both v7x TensorCores), sublane-pad tiny batches."""
    if b > SUB:
        tb = _round_up(pl.cdiv(b, 2), SUB)
    else:
        tb = _round_up(max(b, 1), SUB)
    return min(tb, MAX_TB)


def _vmem_estimate(tb, dp):
    """Rough per-step VMEM footprint (double-buffered tiles + intermediates)."""
    dbuf = 2
    x_b = tb * dp * 4 * dbuf                           # f32 input tiles
    out_b = tb * dp * 2 * dbuf                         # bf16 output tiles
    w_b = (dp * HP + HP * HP + HP * dp) * 2 * dbuf     # bf16 weights
    bias_b = (8 * HP + dp) * 4 * dbuf                  # f32 biases
    interm = tb * dp * 4 + tb * dp * 2 + 2 * tb * HP * 4   # recon f32, x bf16, h/g
    return x_b + out_b + w_b + bias_b + interm


def ae_forward(x_nchw, prepped):
    """x_nchw: [B, C, H, W] float32. Returns bf16 reconstruction, same shape.
    (Cast to f32 outside the kernel only if downstream requires it.)"""
    B, C, H, W = x_nchw.shape
    D = C * H * W
    we1, wmid, wd2, bias_hp, bd2 = prepped
    DP = we1.shape[0]

    x = x_nchw.reshape(B, D)                # f32; bf16 cast happens in-kernel
    if DP != D:
        x = jnp.pad(x, ((0, 0), (0, DP - D)))

    TB = _pick_batch_tile(B)
    # Keep the per-step footprint comfortably inside every generation's VMEM.
    while TB > SUB and _vmem_estimate(TB, DP) > (48 << 20):
        TB //= 2
    BP = _round_up(B, TB)
    if BP != B:
        x = jnp.pad(x, ((0, BP - B), (0, 0)))

    vmem_limit = int(min(max(_vmem_estimate(TB, DP) + (2 << 20), 16 << 20), 64 << 20))

    # TODO(synk): for image-sized D (DP >~ 8K) slab the D axis (inner pipelined
    # loop over D-blocks with we1/wd2 left in HBM via memory_space=pl.ANY and an
    # f32 VMEM accumulator for h); the single-block-over-D layout below would
    # not fit v7x's 64 MiB VMEM at those shapes.
    out = pl.pallas_call(
        ae_forward_kernel,
        out_shape=jax.ShapeDtypeStruct((BP, DP), jnp.bfloat16),
        grid=(BP // TB,),
        in_specs=[
            pl.BlockSpec((TB, DP), lambda i: (i, 0)),   # x (f32): tiled over batch
            pl.BlockSpec((DP, HP), lambda i: (0, 0)),   # we1: VMEM-resident
            pl.BlockSpec((HP, HP), lambda i: (0, 0)),   # folded we2 @ wd1
            pl.BlockSpec((HP, DP), lambda i: (0, 0)),   # wd2
            pl.BlockSpec((8, HP), lambda i: (0, 0)),    # be1 / b_mid (f32)
            pl.BlockSpec((1, DP), lambda i: (0, 0)),    # bd2 (f32)
        ],
        out_specs=pl.BlockSpec((TB, DP), lambda i: (i, 0)),
        compiler_params=pltpu.CompilerParams(
            dimension_semantics=("parallel",),
            vmem_limit_bytes=vmem_limit),
    )(x, we1, wmid, wd2, bias_hp, bd2)

    if BP != B or DP != D:
        out = out[:B, :D]
    return out.reshape(B, C, H, W)


def ae_forward_ref(x_nchw, prepped):
    """Pure-JAX reference mirroring the kernel math (bf16 operands + output,
    f32 accumulation, folded middle layers)."""
    B, C, H, W = x_nchw.shape
    D = C * H * W
    we1, wmid, wd2, bias_hp, bd2 = prepped
    DP = we1.shape[0]

    x = x_nchw.reshape(B, D)
    if DP != D:
        x = jnp.pad(x, ((0, 0), (0, DP - D)))
    xb = x.astype(jnp.bfloat16)

    be1, bmid = bias_hp[0:1, :], bias_hp[1:2, :]
    h = jnp.maximum(jnp.dot(xb, we1, preferred_element_type=jnp.float32) + be1, 0.0)
    g = jnp.maximum(jnp.dot(h.astype(jnp.bfloat16), wmid,
                            preferred_element_type=jnp.float32) + bmid, 0.0)
    recon = jnp.dot(g.astype(jnp.bfloat16), wd2,
                    preferred_element_type=jnp.float32) + bd2
    return recon[:, :D].astype(jnp.bfloat16).reshape(B, C, H, W)


if __name__ == "__main__":
    # Small NCHW shapes consistent with an image autoencoder.
    B, C, H, W = 2, 4, 16, 16
    D = C * H * W        # 1024

    key = jax.random.PRNGKey(0)
    kx, kp = jax.random.split(key)
    x = jax.random.normal(kx, (B, C, H, W), jnp.float32)

    raw_params = init_params(kp, D, HIDDEN, LATENT)
    prepped = prepare_params(raw_params, D)

    recon = jax.block_until_ready(ae_forward(x, prepped))
    assert recon.shape == x.shape

    # Correctness check against the pure-JAX reference using the same params.
    ref = jax.block_until_ready(ae_forward_ref(x, prepped))
    err = float(jnp.max(jnp.abs(recon.astype(jnp.float32) - ref.astype(jnp.float32))))
    assert err < 2e-2, f"mismatch vs reference: {err}"

    # Same reduction as AE.validation_step (forward-only metric, no grad).
    r32 = recon.astype(jnp.float32)
    mse = jnp.mean(jnp.mean((r32 - x).reshape(B, -1) ** 2, axis=1))
    _ = jax.block_until_ready(mse)

    print("KERNEL_OK")
</pallas_src>

<mosaic_0001>
module attributes {stable_mosaic.version = 11 : i64} {
  func.func @ae_forward_kernel(%arg0: i32, %arg1: memref<16x1024xf32, #tpu.memory_space<vmem>>, %arg2: memref<1024x128xbf16, #tpu.memory_space<vmem>>, %arg3: memref<128x128xbf16, #tpu.memory_space<vmem>>, %arg4: memref<128x1024xbf16, #tpu.memory_space<vmem>>, %arg5: memref<8x128xf32, #tpu.memory_space<vmem>>, %arg6: memref<1x1024xf32, #tpu.memory_space<vmem>>, %arg7: memref<16x1024xbf16, #tpu.memory_space<vmem>>) attributes {dimension_semantics = [#tpu.dimension_semantics<parallel>], iteration_bounds = array<i64: 1>, scalar_prefetch = 0 : i64, scratch_operands = 0 : i64, tpu.core_type = #tpu.core_type<tc>, window_params = [{transform_indices = @transform_0, window_bounds = array<i64: 16, 1024>}, {pipeline_mode = #tpu.pipeline_mode<synchronous>, transform_indices = @transform_1, window_bounds = array<i64: 1024, 128>}, {pipeline_mode = #tpu.pipeline_mode<synchronous>, transform_indices = @transform_2, window_bounds = array<i64: 128, 128>}, {pipeline_mode = #tpu.pipeline_mode<synchronous>, transform_indices = @transform_3, window_bounds = array<i64: 128, 1024>}, {pipeline_mode = #tpu.pipeline_mode<synchronous>, transform_indices = @transform_4, window_bounds = array<i64: 8, 128>}, {pipeline_mode = #tpu.pipeline_mode<synchronous>, transform_indices = @transform_5, window_bounds = array<i64: 1, 1024>}, {transform_indices = @transform_6, window_bounds = array<i64: 16, 1024>}]} {
    %c0 = arith.constant 0 : index
    %c0_0 = arith.constant 0 : index
    %0 = vector.load %arg1[%c0, %c0_0] : memref<16x1024xf32, #tpu.memory_space<vmem>>, vector<16x1024xf32>
    %1 = arith.truncf %0 : vector<16x1024xf32> to vector<16x1024xbf16>
    %c0_1 = arith.constant 0 : index
    %c0_2 = arith.constant 0 : index
    %2 = vector.load %arg5[%c0_1, %c0_2] : memref<8x128xf32, #tpu.memory_space<vmem>>, vector<1x128xf32>
    %c1 = arith.constant 1 : index
    %c0_3 = arith.constant 0 : index
    %3 = vector.load %arg5[%c1, %c0_3] : memref<8x128xf32, #tpu.memory_space<vmem>>, vector<1x128xf32>
    %c0_4 = arith.constant 0 : index
    %c0_5 = arith.constant 0 : index
    %4 = vector.load %arg6[%c0_4, %c0_5] : memref<1x1024xf32, #tpu.memory_space<vmem>>, vector<1x1024xf32>
    %c0_6 = arith.constant 0 : index
    %c0_7 = arith.constant 0 : index
    %5 = vector.load %arg2[%c0_6, %c0_7] : memref<1024x128xbf16, #tpu.memory_space<vmem>>, vector<1024x128xbf16>
    %cst = arith.constant dense<0.000000e+00> : vector<16x128xf32>
    %6 = tpu.matmul %1, %5, %cst {dimension_numbers = #tpu.dot_dimension_numbers<[1], [0], [0], [1], [0, 0, 1, 1], [], []>} : vector<16x1024xbf16>, vector<1024x128xbf16>, vector<16x128xf32> -> vector<16x128xf32>
    %7 = vector.broadcast %2 : vector<1x128xf32> to vector<16x128xf32>
    %8 = arith.addf %6, %7 : vector<16x128xf32>
    %cst_8 = arith.constant 0.000000e+00 : f32
    %9 = vector.broadcast %cst_8 : f32 to vector<16x128xf32>
    %10 = arith.maximumf %8, %9 : vector<16x128xf32>
    %11 = arith.truncf %10 : vector<16x128xf32> to vector<16x128xbf16>
    %c0_9 = arith.constant 0 : index
    %c0_10 = arith.constant 0 : index
    %12 = vector.load %arg3[%c0_9, %c0_10] : memref<128x128xbf16, #tpu.memory_space<vmem>>, vector<128x128xbf16>
    %cst_11 = arith.constant dense<0.000000e+00> : vector<16x128xf32>
    %13 = tpu.matmul %11, %12, %cst_11 {dimension_numbers = #tpu.dot_dimension_numbers<[1], [0], [0], [1], [0, 0, 1, 1], [], []>} : vector<16x128xbf16>, vector<128x128xbf16>, vector<16x128xf32> -> vector<16x128xf32>
    %14 = vector.broadcast %3 : vector<1x128xf32> to vector<16x128xf32>
    %15 = arith.addf %13, %14 : vector<16x128xf32>
    %cst_12 = arith.constant 0.000000e+00 : f32
    %16 = vector.broadcast %cst_12 : f32 to vector<16x128xf32>
    %17 = arith.maximumf %15, %16 : vector<16x128xf32>
    %18 = arith.truncf %17 : vector<16x128xf32> to vector<16x128xbf16>
    %c0_13 = arith.constant 0 : index
    %c0_14 = arith.constant 0 : index
    %19 = vector.load %arg4[%c0_13, %c0_14] : memref<128x1024xbf16, #tpu.memory_space<vmem>>, vector<128x1024xbf16>
    %cst_15 = arith.constant dense<0.000000e+00> : vector<16x1024xf32>
    %20 = tpu.matmul %18, %19, %cst_15 {dimension_numbers = #tpu.dot_dimension_numbers<[1], [0], [0], [1], [0, 0, 1, 1], [], []>} : vector<16x128xbf16>, vector<128x1024xbf16>, vector<16x1024xf32> -> vector<16x1024xf32>
    %21 = vector.broadcast %4 : vector<1x1024xf32> to vector<16x1024xf32>
    %22 = arith.addf %20, %21 : vector<16x1024xf32>
    %23 = arith.truncf %22 : vector<16x1024xf32> to vector<16x1024xbf16>
    %c0_16 = arith.constant 0 : index
    %c0_17 = arith.constant 0 : index
    %24 = vector.load %arg7[%c0_16, %c0_17] : memref<16x1024xbf16, #tpu.memory_space<vmem>>, vector<16x1024xbf16>
    tpu.vector_store %arg7[%c0_16, %c0_17], %23 {strides = array<i32>} : memref<16x1024xbf16, #tpu.memory_space<vmem>>, vector<16x1024xbf16>,
    return
  }
  func.func @transform_0(%arg0: i32) -> (i32, i32) {
    %c0_i32 = arith.constant 0 : i32
    %c0_i32_0 = arith.constant 0 : i32
    return %arg0, %c0_i32 : i32, i32
  }
  func.func @transform_1(%arg0: i32) -> (i32, i32) {
    %c0_i32 = arith.constant 0 : i32
    %c0_i32_0 = arith.constant 0 : i32
    %c0_i32_1 = arith.constant 0 : i32
    return %c0_i32, %c0_i32_0 : i32, i32
  }
  func.func @transform_2(%arg0: i32) -> (i32, i32) {
    %c0_i32 = arith.constant 0 : i32
    %c0_i32_0 = arith.constant 0 : i32
    %c0_i32_1 = arith.constant 0 : i32
    return %c0_i32, %c0_i32_0 : i32, i32
  }
  func.func @transform_3(%arg0: i32) -> (i32, i32) {
    %c0_i32 = arith.constant 0 : i32
    %c0_i32_0 = arith.constant 0 : i32
    %c0_i32_1 = arith.constant 0 : i32
    return %c0_i32, %c0_i32_0 : i32, i32
  }
  func.func @transform_4(%arg0: i32) -> (i32, i32) {
    %c0_i32 = arith.constant 0 : i32
    %c0_i32_0 = arith.constant 0 : i32
    %c0_i32_1 = arith.constant 0 : i32
    return %c0_i32, %c0_i32_0 : i32, i32
  }
  func.func @transform_5(%arg0: i32) -> (i32, i32) {
    %c0_i32 = arith.constant 0 : i32
    %c0_i32_0 = arith.constant 0 : i32
    %c0_i32_1 = arith.constant 0 : i32
    return %c0_i32, %c0_i32_0 : i32, i32
  }
  func.func @transform_6(%arg0: i32) -> (i32, i32) {
    %c0_i32 = arith.constant 0 : i32
    %c0_i32_0 = arith.constant 0 : i32
    return %arg0, %c0_i32 : i32, i32
  }
}

</mosaic_0001>

<llo_original>
// kernel: tpu_custom_call.1
$region0: #{tpu_custom_call.1}
  #allocation0 [shape = 'u32[]', space=smem, size = 0x4, offset = 0x4, fixed_abs, tag = 'smem constant byte address 0x4 - core index']
  #allocation1 [shape = 'u32[144,128]{1,0:T(1,128)}', space=vmem, size = 0x12000, scoped, tag = 'internal scratch']
  %s0 = inlined_call_operand.hbm [shape: f32[16,1024], index: 0, kind: input, shape index: {}]
  %s1 = inlined_call_operand.hbm [shape: bf16[1024,128], index: 1, kind: input, shape index: {}]
  %s2 = inlined_call_operand.hbm [shape: bf16[128,128], index: 2, kind: input, shape index: {}]
  %s3 = inlined_call_operand.hbm [shape: bf16[128,1024], index: 3, kind: input, shape index: {}]
  %s4 = inlined_call_operand.hbm [shape: f32[8,128], index: 4, kind: input, shape index: {}]
  %s5 = inlined_call_operand.vmem [shape: f32[1,1024], index: 5, kind: input, shape index: {}]
  %s6 = inlined_call_operand.hbm [shape: bf16[16,1024], index: 6, kind: output, shape index: {}]
  %s7 = sld [smem:[#allocation0]]
  $region54: #{tpu_custom_call.1} parent=0
    _
  %s9 = ssub.s32 1, %s7
  %s10 = scalar_select 0, %s9, %s7
  $region1: #{tpu_custom_call.1} parent=0
    #allocation2 [shape = 'u8[65536]{0}', space=vmem, size = 0x10000, scoped, tag = 'input window, operand 0, single buffered']
    #allocation3 [shape = 's32[1]{0}', space=sflag, size = 0x4, scoped, tag = 'scoped memory for tpu_custom_call.1']
    #allocation4 [shape = 's32[1]{0}', space=sflag, size = 0x4, scoped, tag = 'scoped memory for tpu_custom_call.1']
    #allocation5 [shape = 'u8[262144]{0}', space=vmem, size = 0x40000, scoped, tag = 'input window, operand 1, single buffered']
    #allocation6 [shape = 's32[1]{0}', space=sflag, size = 0x4, scoped, tag = 'scoped memory for tpu_custom_call.1']
    #allocation7 [shape = 'u8[32768]{0}', space=vmem, size = 0x8000, scoped, tag = 'input window, operand 2, single buffered']
    #allocation8 [shape = 'u8[262144]{0}', space=vmem, size = 0x40000, scoped, tag = 'input window, operand 3, single buffered']
    #allocation9 [shape = 's32[1]{0}', space=sflag, size = 0x4, scoped, tag = 'scoped memory for tpu_custom_call.1']
    #allocation10 [shape = 'u8[4096]{0}', space=vmem, size = 0x1000, scoped, tag = 'input window, operand 4, single buffered']
    #allocation11 [shape = 'u8[32768]{0}', space=vmem, size = 0x8000, scoped, tag = 'output window, operand 0, single buffered']
    %11 = vsyncpa [#allocation3], 0
    %12 = vsyncpa [#allocation6], 0
    %13 = vsyncpa [#allocation9], 0
    %14 = vsyncpa [#allocation4], 0
    // Predicated region
    $region2: #{tpu_custom_call.1} parent=1 // pred_check
      _
    $region3: #{tpu_custom_call.1} parent=1 // pred_check_branch
      %16 = sbr.rel (0) target = $region5
    $region4: #{tpu_custom_call.1} parent=1 // pred_region
      %s18 = ssub.s32 2048, 2048
      %19 = vsyncadd [#allocation3], %s18
      %s20 = sshll.u32 [#allocation2], 4
      %s21 = int_to_ptr.vmem [resolvable:$true] %s20
      %26 = dma.hbm_to_vmem [thread:$0]  %s0, 2048, %s21, [#allocation3], 1024, 1024, 64
    $region5: #{tpu_custom_call.1} parent=1 // pred_fallthru
      _
    // Predicated region
    $region6: #{tpu_custom_call.1} parent=1 // pred_check
      _
    $region7: #{tpu_custom_call.1} parent=1 // pred_check_branch
      %28 = sbr.rel (0) target = $region9
    $region8: #{tpu_custom_call.1} parent=1 // pred_region
      %s30 = ssub.s32 8192, 8192
      %31 = vsyncadd [#allocation6], %s30
      %s32 = sshll.u32 [#allocation5], 4
      %s33 = int_to_ptr.vmem [resolvable:$true] %s32
      %38 = dma.hbm_to_vmem [thread:$0]  %s1, 8192, %s33, [#allocation6], 64, 64, 4
    $region9: #{tpu_custom_call.1} parent=1 // pred_fallthru
      _
    // Predicated region
    $region10: #{tpu_custom_call.1} parent=1 // pred_check
      _
    $region11: #{tpu_custom_call.1} parent=1 // pred_check_branch
      %40 = sbr.rel (0) target = $region13
    $region12: #{tpu_custom_call.1} parent=1 // pred_region
      %s42 = ssub.s32 1024, 1024
      %43 = vsyncadd [#allocation6], %s42
      %s44 = sshll.u32 [#allocation7], 4
      %s45 = int_to_ptr.vmem [resolvable:$true] %s44
      %50 = dma.hbm_to_vmem [thread:$0]  %s2, 1024, %s45, [#allocation6], 64, 64, 4
    $region13: #{tpu_custom_call.1} parent=1 // pred_fallthru
      _
    // Predicated region
    $region14: #{tpu_custom_call.1} parent=1 // pred_check
      _
    $region15: #{tpu_custom_call.1} parent=1 // pred_check_branch
      %52 = sbr.rel (0) target = $region17
    $region16: #{tpu_custom_call.1} parent=1 // pred_region
      %s54 = ssub.s32 8192, 8192
      %55 = vsyncadd [#allocation9], %s54
      %s56 = sshll.u32 [#allocation8], 4
      %s57 = int_to_ptr.vmem [resolvable:$true] %s56
      %62 = dma.hbm_to_vmem [thread:$0]  %s3, 8192, %s57, [#allocation9], 512, 512, 32
    $region17: #{tpu_custom_call.1} parent=1 // pred_fallthru
      _
    // Predicated region
    $region18: #{tpu_custom_call.1} parent=1 // pred_check
      _
    $region19: #{tpu_custom_call.1} parent=1 // pred_check_branch
      %64 = sbr.rel (0) target = $region21
    $region20: #{tpu_custom_call.1} parent=1 // pred_region
      %s66 = ssub.s32 128, 128
      %67 = vsyncadd [#allocation9], %s66
      %s69 = sshll.u32 [#allocation10], 4
      %s70 = int_to_ptr.vmem [resolvable:$true] %s69
      %72 = dma.hbm_to_vmem [thread:$0]  %s4, 128, %s70, [#allocation9]
    $region21: #{tpu_custom_call.1} parent=1 // pred_fallthru
      _
    // Predicated region
    $region22: #{tpu_custom_call.1} parent=1 // pred_check
      _
    $region23: #{tpu_custom_call.1} parent=1 // pred_check_branch
      %74 = sbr.rel (0) target = $region25
    $region24: #{tpu_custom_call.1} parent=1 // pred_region
      _
    $region25: #{tpu_custom_call.1} parent=1 // pred_fallthru
      _
    // Predicated region
    $region26: #{tpu_custom_call.1} parent=1 // pred_check
      _
    $region27: #{tpu_custom_call.1} parent=1 // pred_check_branch
      %76 = sbr.rel (0) target = $region29
    $region28: #{tpu_custom_call.1} parent=1 // pred_region
      %77 = dma.done [#allocation3], 2048
    $region29: #{tpu_custom_call.1} parent=1 // pred_fallthru
      _
    // Predicated region
    $region30: #{tpu_custom_call.1} parent=1 // pred_check
      _
    $region31: #{tpu_custom_call.1} parent=1 // pred_check_branch
      %79 = sbr.rel (0) target = $region33
    $region32: #{tpu_custom_call.1} parent=1 // pred_region
      %80 = dma.done [#allocation6], 8192
    $region33: #{tpu_custom_call.1} parent=1 // pred_fallthru
      _
    // Predicated region
    $region34: #{tpu_custom_call.1} parent=1 // pred_check
      _
    $region35: #{tpu_custom_call.1} parent=1 // pred_check_branch
      %82 = sbr.rel (0) target = $region37
    $region36: #{tpu_custom_call.1} parent=1 // pred_region
      %83 = dma.done [#allocation6], 1024
    $region37: #{tpu_custom_call.1} parent=1 // pred_fallthru
      _
    // Predicated region
    $region38: #{tpu_custom_call.1} parent=1 // pred_check
      _
    $region39: #{tpu_custom_call.1} parent=1 // pred_check_branch
      %85 = sbr.rel (0) target = $region41
    $region40: #{tpu_custom_call.1} parent=1 // pred_region
      %86 = dma.done [#allocation9], 8192
    $region41: #{tpu_custom_call.1} parent=1 // pred_fallthru
      _
    // Predicated region
    $region42: #{tpu_custom_call.1} parent=1 // pred_check
      _
    $region43: #{tpu_custom_call.1} parent=1 // pred_check_branch
      %88 = sbr.rel (0) target = $region45
    $region44: #{tpu_custom_call.1} parent=1 // pred_region
      %89 = dma.done [#allocation9], 128
    $region45: #{tpu_custom_call.1} parent=1 // pred_fallthru
      _
    %v91 = vld [vmem:[#allocation2] sm:$0xff]
    %v92 = vld [vmem:[#allocation2 + $0x8] sm:$0xff]
    %v93 = vld [vmem:[#allocation2 + $0x10] sm:$0xff]
    %v94 = vld [vmem:[#allocation2 + $0x18] sm:$0xff]
    %v95 = vld [vmem:[#allocation2 + $0x20] sm:$0xff]
    %v96 = vld [vmem:[#allocation2 + $0x28] sm:$0xff]
    %v97 = vld [vmem:[#allocation2 + $0x30] sm:$0xff]
    %v98 = vld [vmem:[#allocation2 + $0x38] sm:$0xff]
    %v99 = vld [vmem:[#allocation2 + $0x40] sm:$0xff]
    %v100 = vld [vmem:[#allocation2 + $0x48] sm:$0xff]
    %v101 = vld [vmem:[#allocation2 + $0x50] sm:$0xff]
    %v102 = vld [vmem:[#allocation2 + $0x58] sm:$0xff]
    %v103 = vld [vmem:[#allocation2 + $0x60] sm:$0xff]
    %v104 = vld [vmem:[#allocation2 + $0x68] sm:$0xff]
    %v105 = vld [vmem:[#allocation2 + $0x70] sm:$0xff]
    %v106 = vld [vmem:[#allocation2 + $0x78] sm:$0xff]
    %v107 = vpack.c.bf16 %v99, %v91
    %v108 = vpack.c.bf16 %v100, %v92
    %v109 = vpack.c.bf16 %v101, %v93
    %v110 = vpack.c.bf16 %v102, %v94
    %v111 = vpack.c.bf16 %v103, %v95
    %v112 = vpack.c.bf16 %v104, %v96
    %v113 = vpack.c.bf16 %v105, %v97
    %v114 = vpack.c.bf16 %v106, %v98
    %v115 = vld [vmem:[#allocation10] sm:$0x1]
    %v116 = vld [vmem:[#allocation10 + $0x1] sm:$0x1]
    %v117 = vld [vmem:[%s5] sm:$0xff]
    %v118 = vld [vmem:[#allocation5] sm:$0xf]
    %v119 = vld [vmem:[#allocation5 + $0x4] sm:$0xf]
    %v120 = vld [vmem:[#allocation5 + $0x8] sm:$0xf]
    %v121 = vld [vmem:[#allocation5 + $0xc] sm:$0xf]
    %v122 = vld [vmem:[#allocation5 + $0x10] sm:$0xf]
    %v123 = vld [vmem:[#allocation5 + $0x14] sm:$0xf]
    %v124 = vld [vmem:[#allocation5 + $0x18] sm:$0xf]
    %v125 = vld [vmem:[#allocation5 + $0x1c] sm:$0xf]
    %v126 = vld [vmem:[#allocation5 + $0x20] sm:$0xf]
    %v127 = vld [vmem:[#allocation5 + $0x24] sm:$0xf]
    %v128 = vld [vmem:[#allocation5 + $0x28] sm:$0xf]
    %v129 = vld [vmem:[#allocation5 + $0x2c] sm:$0xf]
    %v130 = vld [vmem:[#allocation5 + $0x30] sm:$0xf]
    %v131 = vld [vmem:[#allocation5 + $0x34] sm:$0xf]
    %v132 = vld [vmem:[#allocation5 + $0x38] sm:$0xf]
    %v133 = vld [vmem:[#allocation5 + $0x3c] sm:$0xf]
    %v134 = vld [vmem:[#allocation5 + $0x40] sm:$0xf]
    %v135 = vld [vmem:[#allocation5 + $0x44] sm:$0xf]
    %v136 = vld [vmem:[#allocation5 + $0x48] sm:$0xf]
    %v137 = vld [vmem:[#allocation5 + $0x4c] sm:$0xf]
    %v138 = vld [vmem:[#allocation5 + $0x50] sm:$0xf]
    %v139 = vld [vmem:[#allocation5 + $0x54] sm:$0xf]
    %v140 = vld [vmem:[#allocation5 + $0x58] sm:$0xf]
    %v141 = vld [vmem:[#allocation5 + $0x5c] sm:$0xf]
    %v142 = vld [vmem:[#allocation5 + $0x60] sm:$0xf]
    %v143 = vld [vmem:[#allocation5 + $0x64] sm:$0xf]
    %v144 = vld [vmem:[#allocation5 + $0x68] sm:$0xf]
    %v145 = vld [vmem:[#allocation5 + $0x6c] sm:$0xf]
    %v146 = vld [vmem:[#allocation5 + $0x70] sm:$0xf]
    %v147 = vld [vmem:[#allocation5 + $0x74] sm:$0xf]
    %v148 = vld [vmem:[#allocation5 + $0x78] sm:$0xf]
    %v149 = vld [vmem:[#allocation5 + $0x7c] sm:$0xf]
    %v150 = vld [vmem:[#allocation5 + $0x80] sm:$0xf]
    %v151 = vld [vmem:[#allocation5 + $0x84] sm:$0xf]
    %v152 = vld [vmem:[#allocation5 + $0x88] sm:$0xf]
    %v153 = vld [vmem:[#allocation5 + $0x8c] sm:$0xf]
    %v154 = vld [vmem:[#allocation5 + $0x90] sm:$0xf]
    %v155 = vld [vmem:[#allocation5 + $0x94] sm:$0xf]
    %v156 = vld [vmem:[#allocation5 + $0x98] sm:$0xf]
    %v157 = vld [vmem:[#allocation5 + $0x9c] sm:$0xf]
    %v158 = vld [vmem:[#allocation5 + $0xa0] sm:$0xf]
    %v159 = vld [vmem:[#allocation5 + $0xa4] sm:$0xf]
    %v160 = vld [vmem:[#allocation5 + $0xa8] sm:$0xf]
    %v161 = vld [vmem:[#allocation5 + $0xac] sm:$0xf]
    %v162 = vld [vmem:[#allocation5 + $0xb0] sm:$0xf]
    %v163 = vld [vmem:[#allocation5 + $0xb4] sm:$0xf]
    %v164 = vld [vmem:[#allocation5 + $0xb8] sm:$0xf]
    %v165 = vld [vmem:[#allocation5 + $0xbc] sm:$0xf]
    %v166 = vld [vmem:[#allocation5 + $0xc0] sm:$0xf]
    %v167 = vld [vmem:[#allocation5 + $0xc4] sm:$0xf]
    %v168 = vld [vmem:[#allocation5 + $0xc8] sm:$0xf]
    %v169 = vld [vmem:[#allocation5 + $0xcc] sm:$0xf]
    %v170 = vld [vmem:[#allocation5 + $0xd0] sm:$0xf]
    %v171 = vld [vmem:[#allocation5 + $0xd4] sm:$0xf]
    %v172 = vld [vmem:[#allocation5 + $0xd8] sm:$0xf]
    %v173 = vld [vmem:[#allocation5 + $0xdc] sm:$0xf]
    %v174 = vld [vmem:[#allocation5 + $0xe0] sm:$0xf]
    %v175 = vld [vmem:[#allocation5 + $0xe4] sm:$0xf]
    %v176 = vld [vmem:[#allocation5 + $0xe8] sm:$0xf]
    %v177 = vld [vmem:[#allocation5 + $0xec] sm:$0xf]
    %v178 = vld [vmem:[#allocation5 + $0xf0] sm:$0xf]
    %v179 = vld [vmem:[#allocation5 + $0xf4] sm:$0xf]
    %v180 = vld [vmem:[#allocation5 + $0xf8] sm:$0xf]
    %v181 = vld [vmem:[#allocation5 + $0xfc] sm:$0xf]
    %v182 = vld [vmem:[#allocation5 + $0x100] sm:$0xf]
    %v183 = vld [vmem:[#allocation5 + $0x104] sm:$0xf]
    %v184 = vld [vmem:[#allocation5 + $0x108] sm:$0xf]
    %v185 = vld [vmem:[#allocation5 + $0x10c] sm:$0xf]
    %v186 = vld [vmem:[#allocation5 + $0x110] sm:$0xf]
    %v187 = vld [vmem:[#allocation5 + $0x114] sm:$0xf]
    %v188 = vld [vmem:[#allocation5 + $0x118] sm:$0xf]
    %v189 = vld [vmem:[#allocation5 + $0x11c] sm:$0xf]
    %v190 = vld [vmem:[#allocation5 + $0x120] sm:$0xf]
    %v191 = vld [vmem:[#allocation5 + $0x124] sm:$0xf]
    %v192 = vld [vmem:[#allocation5 + $0x128] sm:$0xf]
    %v193 = vld [vmem:[#allocation5 + $0x12c] sm:$0xf]
    %v194 = vld [vmem:[#allocation5 + $0x130] sm:$0xf]
    %v195 = vld [vmem:[#allocation5 + $0x134] sm:$0xf]
    %v196 = vld [vmem:[#allocation5 + $0x138] sm:$0xf]
    %v197 = vld [vmem:[#allocation5 + $0x13c] sm:$0xf]
    %v198 = vld [vmem:[#allocation5 + $0x140] sm:$0xf]
    %v199 = vld [vmem:[#allocation5 + $0x144] sm:$0xf]
    %v200 = vld [vmem:[#allocation5 + $0x148] sm:$0xf]
    %v201 = vld [vmem:[#allocation5 + $0x14c] sm:$0xf]
    %v202 = vld [vmem:[#allocation5 + $0x150] sm:$0xf]
    %v203 = vld [vmem:[#allocation5 + $0x154] sm:$0xf]
    %v204 = vld [vmem:[#allocation5 + $0x158] sm:$0xf]
    %v205 = vld [vmem:[#allocation5 + $0x15c] sm:$0xf]
    %v206 = vld [vmem:[#allocation5 + $0x160] sm:$0xf]
    %v207 = vld [vmem:[#allocation5 + $0x164] sm:$0xf]
    %v208 = vld [vmem:[#allocation5 + $0x168] sm:$0xf]
    %v209 = vld [vmem:[#allocation5 + $0x16c] sm:$0xf]
    %v210 = vld [vmem:[#allocation5 + $0x170] sm:$0xf]
    %v211 = vld [vmem:[#allocation5 + $0x174] sm:$0xf]
    %v212 = vld [vmem:[#allocation5 + $0x178] sm:$0xf]
    %v213 = vld [vmem:[#allocation5 + $0x17c] sm:$0xf]
    %v214 = vld [vmem:[#allocation5 + $0x180] sm:$0xf]
    %v215 = vld [vmem:[#allocation5 + $0x184] sm:$0xf]
    %v216 = vld [vmem:[#allocation5 + $0x188] sm:$0xf]
    %v217 = vld [vmem:[#allocation5 + $0x18c] sm:$0xf]
    %v218 = vld [vmem:[#allocation5 + $0x190] sm:$0xf]
    %v219 = vld [vmem:[#allocation5 + $0x194] sm:$0xf]
    %v220 = vld [vmem:[#allocation5 + $0x198] sm:$0xf]
    %v221 = vld [vmem:[#allocation5 + $0x19c] sm:$0xf]
    %v222 = vld [vmem:[#allocation5 + $0x1a0] sm:$0xf]
    %v223 = vld [vmem:[#allocation5 + $0x1a4] sm:$0xf]
    %v224 = vld [vmem:[#allocation5 + $0x1a8] sm:$0xf]
    %v225 = vld [vmem:[#allocation5 + $0x1ac] sm:$0xf]
    %v226 = vld [vmem:[#allocation5 + $0x1b0] sm:$0xf]
    %v227 = vld [vmem:[#allocation5 + $0x1b4] sm:$0xf]
    %v228 = vld [vmem:[#allocation5 + $0x1b8] sm:$0xf]
    %v229 = vld [vmem:[#allocation5 + $0x1bc] sm:$0xf]
    %v230 = vld [vmem:[#allocation5 + $0x1c0] sm:$0xf]
    %v231 = vld [vmem:[#allocation5 + $0x1c4] sm:$0xf]
    %v232 = vld [vmem:[#allocation5 + $0x1c8] sm:$0xf]
    %v233 = vld [vmem:[#allocation5 + $0x1cc] sm:$0xf]
    %v234 = vld [vmem:[#allocation5 + $0x1d0] sm:$0xf]
    %v235 = vld [vmem:[#allocation5 + $0x1d4] sm:$0xf]
    %v236 = vld [vmem:[#allocation5 + $0x1d8] sm:$0xf]
    %v237 = vld [vmem:[#allocation5 + $0x1dc] sm:$0xf]
    %v238 = vld [vmem:[#allocation5 + $0x1e0] sm:$0xf]
    %v239 = vld [vmem:[#allocation5 + $0x1e4] sm:$0xf]
    %v240 = vld [vmem:[#allocation5 + $0x1e8] sm:$0xf]
    %v241 = vld [vmem:[#allocation5 + $0x1ec] sm:$0xf]
    %v242 = vld [vmem:[#allocation5 + $0x1f0] sm:$0xf]
    %v243 = vld [vmem:[#allocation5 + $0x1f4] sm:$0xf]
    %v244 = vld [vmem:[#allocation5 + $0x1f8] sm:$0xf]
    %v245 = vld [vmem:[#allocation5 + $0x1fc] sm:$0xf]
    %v246 = vlaneseq
    %v247 = vshrl.u32 %v246, 7
    %v248 = vsub.s32 0, %v247
    %v249 = vrot.slane %v115, %v248
    %v378 = vunpack.c.l.b16 %v118
    %v379 = vunpack.c.l.b16 %v119
    %v380 = vunpack.c.l.b16 %v120
    %v381 = vunpack.c.l.b16 %v121
    %v382 = vunpack.c.l.b16 %v122
    %v383 = vunpack.c.l.b16 %v123
    %v384 = vunpack.c.l.b16 %v124
    %v385 = vunpack.c.l.b16 %v125
    %v386 = vunpack.c.l.b16 %v126
    %v387 = vunpack.c.l.b16 %v127
    %v388 = vunpack.c.l.b16 %v128
    %v389 = vunpack.c.l.b16 %v129
    %v390 = vunpack.c.l.b16 %v130
    %v391 = vunpack.c.l.b16 %v131
    %v392 = vunpack.c.l.b16 %v132
    %v393 = vunpack.c.l.b16 %v133
    %v394 = vunpack.c.l.b16 %v134
    %v395 = vunpack.c.l.b16 %v135
    %v396 = vunpack.c.l.b16 %v136
    %v397 = vunpack.c.l.b16 %v137
    %v398 = vunpack.c.l.b16 %v138
    %v399 = vunpack.c.l.b16 %v139
    %v400 = vunpack.c.l.b16 %v140
    %v401 = vunpack.c.l.b16 %v141
    %v402 = vunpack.c.l.b16 %v142
    %v403 = vunpack.c.l.b16 %v143
    %v404 = vunpack.c.l.b16 %v144
    %v405 = vunpack.c.l.b16 %v145
    %v406 = vunpack.c.l.b16 %v146
    %v407 = vunpack.c.l.b16 %v147
    %v408 = vunpack.c.l.b16 %v148
    %v409 = vunpack.c.l.b16 %v149
    %v410 = vunpack.c.l.b16 %v150
    %v411 = vunpack.c.l.b16 %v151
    %v412 = vunpack.c.l.b16 %v152
    %v413 = vunpack.c.l.b16 %v153
    %v414 = vunpack.c.l.b16 %v154
    %v415 = vunpack.c.l.b16 %v155
    %v416 = vunpack.c.l.b16 %v156
    %v417 = vunpack.c.l.b16 %v157
    %v418 = vunpack.c.l.b16 %v158
    %v419 = vunpack.c.l.b16 %v159
    %v420 = vunpack.c.l.b16 %v160
    %v421 = vunpack.c.l.b16 %v161
    %v422 = vunpack.c.l.b16 %v162
    %v423 = vunpack.c.l.b16 %v163
    %v424 = vunpack.c.l.b16 %v164
    %v425 = vunpack.c.l.b16 %v165
    %v426 = vunpack.c.l.b16 %v166
    %v427 = vunpack.c.l.b16 %v167
    %v428 = vunpack.c.l.b16 %v168
    %v429 = vunpack.c.l.b16 %v169
    %v430 = vunpack.c.l.b16 %v170
    %v431 = vunpack.c.l.b16 %v171
    %v432 = vunpack.c.l.b16 %v172
    %v433 = vunpack.c.l.b16 %v173
    %v434 = vunpack.c.l.b16 %v174
    %v435 = vunpack.c.l.b16 %v175
    %v436 = vunpack.c.l.b16 %v176
    %v437 = vunpack.c.l.b16 %v177
    %v438 = vunpack.c.l.b16 %v178
    %v439 = vunpack.c.l.b16 %v179
    %v440 = vunpack.c.l.b16 %v180
    %v441 = vunpack.c.l.b16 %v181
    %v442 = vunpack.c.l.b16 %v182
    %v443 = vunpack.c.l.b16 %v183
    %v444 = vunpack.c.l.b16 %v184
    %v445 = vunpack.c.l.b16 %v185
    %v446 = vunpack.c.l.b16 %v186
    %v447 = vunpack.c.l.b16 %v187
    %v448 = vunpack.c.l.b16 %v188
    %v449 = vunpack.c.l.b16 %v189
    %v450 = vunpack.c.l.b16 %v190
    %v451 = vunpack.c.l.b16 %v191
    %v452 = vunpack.c.l.b16 %v192
    %v453 = vunpack.c.l.b16 %v193
    %v454 = vunpack.c.l.b16 %v194
    %v455 = vunpack.c.l.b16 %v195
    %v456 = vunpack.c.l.b16 %v196
    %v457 = vunpack.c.l.b16 %v197
    %v458 = vunpack.c.l.b16 %v198
    %v459 = vunpack.c.l.b16 %v199
    %v460 = vunpack.c.l.b16 %v200
    %v461 = vunpack.c.l.b16 %v201
    %v462 = vunpack.c.l.b16 %v202
    %v463 = vunpack.c.l.b16 %v203
    %v464 = vunpack.c.l.b16 %v204
    %v465 = vunpack.c.l.b16 %v205
    %v466 = vunpack.c.l.b16 %v206
    %v467 = vunpack.c.l.b16 %v207
    %v468 = vunpack.c.l.b16 %v208
    %v469 = vunpack.c.l.b16 %v209
    %v470 = vunpack.c.l.b16 %v210
    %v471 = vunpack.c.l.b16 %v211
    %v472 = vunpack.c.l.b16 %v212
    %v473 = vunpack.c.l.b16 %v213
    %v474 = vunpack.c.l.b16 %v214
    %v475 = vunpack.c.l.b16 %v215
    %v476 = vunpack.c.l.b16 %v216
    %v477 = vunpack.c.l.b16 %v217
    %v478 = vunpack.c.l.b16 %v218
    %v479 = vunpack.c.l.b16 %v219
    %v480 = vunpack.c.l.b16 %v220
    %v481 = vunpack.c.l.b16 %v221
    %v482 = vunpack.c.l.b16 %v222
    %v483 = vunpack.c.l.b16 %v223
    %v484 = vunpack.c.l.b16 %v224
    %v485 = vunpack.c.l.b16 %v225
    %v486 = vunpack.c.l.b16 %v226
    %v487 = vunpack.c.l.b16 %v227
    %v488 = vunpack.c.l.b16 %v228
    %v489 = vunpack.c.l.b16 %v229
    %v490 = vunpack.c.l.b16 %v230
    %v491 = vunpack.c.l.b16 %v231
    %v492 = vunpack.c.l.b16 %v232
    %v493 = vunpack.c.l.b16 %v233
    %v494 = vunpack.c.l.b16 %v234
    %v495 = vunpack.c.l.b16 %v235
    %v496 = vunpack.c.l.b16 %v236
    %v497 = vunpack.c.l.b16 %v237
    %v498 = vunpack.c.l.b16 %v238
    %v499 = vunpack.c.l.b16 %v239
    %v500 = vunpack.c.l.b16 %v240
    %v501 = vunpack.c.l.b16 %v241
    %v502 = vunpack.c.l.b16 %v242
    %v503 = vunpack.c.l.b16 %v243
    %v504 = vunpack.c.l.b16 %v244
    %v505 = vunpack.c.l.b16 %v245
    %v506 = vpack.c.b16 %v379, %v378
    %v507 = vpack.c.b16 %v381, %v380
    %v508 = vpack.c.b16 %v383, %v382
    %v509 = vpack.c.b16 %v385, %v384
    %v510 = vpack.c.b16 %v387, %v386
    %v511 = vpack.c.b16 %v389, %v388
    %v512 = vpack.c.b16 %v391, %v390
    %v513 = vpack.c.b16 %v393, %v392
    %v514 = vpack.c.b16 %v395, %v394
    %v515 = vpack.c.b16 %v397, %v396
    %v516 = vpack.c.b16 %v399, %v398
    %v517 = vpack.c.b16 %v401, %v400
    %v518 = vpack.c.b16 %v403, %v402
    %v519 = vpack.c.b16 %v405, %v404
    %v520 = vpack.c.b16 %v407, %v406
    %v521 = vpack.c.b16 %v409, %v408
    %v522 = vpack.c.b16 %v411, %v410
    %v523 = vpack.c.b16 %v413, %v412
    %v524 = vpack.c.b16 %v415, %v414
    %v525 = vpack.c.b16 %v417, %v416
    %v526 = vpack.c.b16 %v419, %v418
    %v527 = vpack.c.b16 %v421, %v420
    %v528 = vpack.c.b16 %v423, %v422
    %v529 = vpack.c.b16 %v425, %v424
    %v530 = vpack.c.b16 %v427, %v426
    %v531 = vpack.c.b16 %v429, %v428
    %v532 = vpack.c.b16 %v431, %v430
    %v533 = vpack.c.b16 %v433, %v432
    %v534 = vpack.c.b16 %v435, %v434
    %v535 = vpack.c.b16 %v437, %v436
    %v536 = vpack.c.b16 %v439, %v438
    %v537 = vpack.c.b16 %v441, %v440
    %v538 = vpack.c.b16 %v443, %v442
    %v539 = vpack.c.b16 %v445, %v444
    %v540 = vpack.c.b16 %v447, %v446
    %v541 = vpack.c.b16 %v449, %v448
    %v542 = vpack.c.b16 %v451, %v450
    %v543 = vpack.c.b16 %v453, %v452
    %v544 = vpack.c.b16 %v455, %v454
    %v545 = vpack.c.b16 %v457, %v456
    %v546 = vpack.c.b16 %v459, %v458
    %v547 = vpack.c.b16 %v461, %v460
    %v548 = vpack.c.b16 %v463, %v462
    %v549 = vpack.c.b16 %v465, %v464
    %v550 = vpack.c.b16 %v467, %v466
    %v551 = vpack.c.b16 %v469, %v468
    %v552 = vpack.c.b16 %v471, %v470
    %v553 = vpack.c.b16 %v473, %v472
    %v554 = vpack.c.b16 %v475, %v474
    %v555 = vpack.c.b16 %v477, %v476
    %v556 = vpack.c.b16 %v479, %v478
    %v557 = vpack.c.b16 %v481, %v480
    %v558 = vpack.c.b16 %v483, %v482
    %v559 = vpack.c.b16 %v485, %v484
    %v560 = vpack.c.b16 %v487, %v486
    %v561 = vpack.c.b16 %v489, %v488
    %v562 = vpack.c.b16 %v491, %v490
    %v563 = vpack.c.b16 %v493, %v492
    %v564 = vpack.c.b16 %v495, %v494
    %v565 = vpack.c.b16 %v497, %v496
    %v566 = vpack.c.b16 %v499, %v498
    %v567 = vpack.c.b16 %v501, %v500
    %v568 = vpack.c.b16 %v503, %v502
    %v569 = vpack.c.b16 %v505, %v504
    %634 = vmatprep.subr.bf16.mxu0 0
    %635 = vmatpush1.bf16.msra.mxu0 %v513
    %636 = vmatprep.subr.bf16.mxu0 0
    %637 = vmatpush1.bf16.msra.mxu0 %v512
    %638 = vmatprep.subr.bf16.mxu0 0
    %639 = vmatpush1.bf16.msra.mxu0 %v511
    %640 = vmatprep.subr.bf16.mxu0 0
    %641 = vmatpush1.bf16.msra.mxu0 %v510
    %642 = vmatprep.subr.bf16.mxu0 0
    %643 = vmatpush1.bf16.msra.mxu0 %v509
    %644 = vmatprep.subr.bf16.mxu0 0
    %645 = vmatpush1.bf16.msra.mxu0 %v508
    %646 = vmatprep.subr.bf16.mxu0 0
    %647 = vmatpush1.bf16.msra.mxu0 %v507
    %648 = vmatprep.subr.bf16.mxu0 0
    %649 = vmatpush1.bf16.msra.mxu0 %v506
    %650 = vmatprep.subr.bf16.mxu0 0
    %651 = vmatpush2.bf16.msra.mxu0 %v521
    %652 = vmatprep.subr.bf16.mxu0 0
    %653 = vmatpush2.bf16.msra.mxu0 %v520
    %654 = vmatprep.subr.bf16.mxu0 0
    %655 = vmatpush2.bf16.msra.mxu0 %v519
    %656 = vmatprep.subr.bf16.mxu0 0
    %657 = vmatpush2.bf16.msra.mxu0 %v518
    %658 = vmatprep.subr.bf16.mxu0 0
    %659 = vmatpush2.bf16.msra.mxu0 %v517
    %660 = vmatprep.subr.bf16.mxu0 0
    %661 = vmatpush2.bf16.msra.mxu0 %v516
    %662 = vmatprep.subr.bf16.mxu0 0
    %663 = vmatpush2.bf16.msra.mxu0 %v515
    %664 = vmatprep.subr.bf16.mxu0 0
    %665 = vmatpush2.bf16.msra.mxu0 %v514
    %666 = vmatprep.mubr.bf16.mxu0 %v108
    %667 = vmatmul.mubr.bf16.gmra.mxu0 %v107
    %v668 = vpop.f32.mrf.mxu0
    %v669 = vadd.f32 %v249, %v668
    %v670 = vpop.f32.mrf.mxu0
    %v671 = vpop.f32.mrf.mxu0
    %v672 = vadd.f32 %v249, %v671
    %v673 = vpop.f32.mrf.mxu0
    %674 = vdwg.mxu0
    %675 = vmatprep.subr.bf16.mxu0 0
    %676 = vmatpush1.bf16.msra.mxu0 %v529
    %677 = vmatprep.subr.bf16.mxu0 0
    %678 = vmatpush1.bf16.msra.mxu0 %v528
    %679 = vmatprep.subr.bf16.mxu0 0
    %680 = vmatpush1.bf16.msra.mxu0 %v527
    %681 = vmatprep.subr.bf16.mxu0 0
    %682 = vmatpush1.bf16.msra.mxu0 %v526
    %683 = vmatprep.subr.bf16.mxu0 0
    %684 = vmatpush1.bf16.msra.mxu0 %v525
    %685 = vmatprep.subr.bf16.mxu0 0
    %686 = vmatpush1.bf16.msra.mxu0 %v524
    %687 = vmatprep.subr.bf16.mxu0 0
    %688 = vmatpush1.bf16.msra.mxu0 %v523
    %689 = vmatprep.subr.bf16.mxu0 0
    %690 = vmatpush1.bf16.msra.mxu0 %v522
    %691 = vmatprep.subr.bf16.mxu0 0
    %692 = vmatpush2.bf16.msra.mxu0 %v537
    %693 = vmatprep.subr.bf16.mxu0 0
    %694 = vmatpush2.bf16.msra.mxu0 %v536
    %695 = vmatprep.subr.bf16.mxu0 0
    %696 = vmatpush2.bf16.msra.mxu0 %v535
    %697 = vmatprep.subr.bf16.mxu0 0
    %698 = vmatpush2.bf16.msra.mxu0 %v534
    %699 = vmatprep.subr.bf16.mxu0 0
    %700 = vmatpush2.bf16.msra.mxu0 %v533
    %701 = vmatprep.subr.bf16.mxu0 0
    %702 = vmatpush2.bf16.msra.mxu0 %v532
    %703 = vmatprep.subr.bf16.mxu0 0
    %704 = vmatpush2.bf16.msra.mxu0 %v531
    %705 = vmatprep.subr.bf16.mxu0 0
    %706 = vmatpush2.bf16.msra.mxu0 %v530
    %707 = vmatprep.mubr.bf16.mxu0 %v110
    %708 = vmatmul.mubr.bf16.gmra.mxu0 %v109
    %v709 = vpop.f32.mrf.mxu0
    %v710 = vadd.f32 %v669, %v709
    %v711 = vpop.f32.mrf.mxu0
    %v712 = vpop.f32.mrf.mxu0
    %v713 = vadd.f32 %v672, %v712
    %v714 = vpop.f32.mrf.mxu0
    %715 = vdwg.mxu0
    %716 = vmatprep.subr.bf16.mxu0 0
    %717 = vmatpush1.bf16.msra.mxu0 %v545
    %718 = vmatprep.subr.bf16.mxu0 0
    %719 = vmatpush1.bf16.msra.mxu0 %v544
    %720 = vmatprep.subr.bf16.mxu0 0
    %721 = vmatpush1.bf16.msra.mxu0 %v543
    %722 = vmatprep.subr.bf16.mxu0 0
    %723 = vmatpush1.bf16.msra.mxu0 %v542
    %724 = vmatprep.subr.bf16.mxu0 0
    %725 = vmatpush1.bf16.msra.mxu0 %v541
    %726 = vmatprep.subr.bf16.mxu0 0
    %727 = vmatpush1.bf16.msra.mxu0 %v540
    %728 = vmatprep.subr.bf16.mxu0 0
    %729 = vmatpush1.bf16.msra.mxu0 %v539
    %730 = vmatprep.subr.bf16.mxu0 0
    %731 = vmatpush1.bf16.msra.mxu0 %v538
    %732 = vmatprep.subr.bf16.mxu0 0
    %733 = vmatpush2.bf16.msra.mxu0 %v553
    %734 = vmatprep.subr.bf16.mxu0 0
    %735 = vmatpush2.bf16.msra.mxu0 %v552
    %736 = vmatprep.subr.bf16.mxu0 0
    %737 = vmatpush2.bf16.msra.mxu0 %v551
    %738 = vmatprep.subr.bf16.mxu0 0
    %739 = vmatpush2.bf16.msra.mxu0 %v550
    %740 = vmatprep.subr.bf16.mxu0 0
    %741 = vmatpush2.bf16.msra.mxu0 %v549
    %742 = vmatprep.subr.bf16.mxu0 0
    %743 = vmatpush2.bf16.msra.mxu0 %v548
    %744 = vmatprep.subr.bf16.mxu0 0
    %745 = vmatpush2.bf16.msra.mxu0 %v547
    %746 = vmatprep.subr.bf16.mxu0 0
    %747 = vmatpush2.bf16.msra.mxu0 %v546
    %748 = vmatprep.mubr.bf16.mxu0 %v112
    %749 = vmatmul.mubr.bf16.gmra.mxu0 %v111
    %v750 = vpop.f32.mrf.mxu0
    %v751 = vadd.f32 %v710, %v750
    %v752 = vpop.f32.mrf.mxu0
    %v753 = vpop.f32.mrf.mxu0
    %v754 = vadd.f32 %v713, %v753
    %v755 = vpop.f32.mrf.mxu0
    %756 = vdwg.mxu0
    %757 = vmatprep.subr.bf16.mxu0 0
    %758 = vmatpush1.bf16.msra.mxu0 %v561
    %759 = vmatprep.subr.bf16.mxu0 0
    %760 = vmatpush1.bf16.msra.mxu0 %v560
    %761 = vmatprep.subr.bf16.mxu0 0
    %762 = vmatpush1.bf16.msra.mxu0 %v559
    %763 = vmatprep.subr.bf16.mxu0 0
    %764 = vmatpush1.bf16.msra.mxu0 %v558
    %765 = vmatprep.subr.bf16.mxu0 0
    %766 = vmatpush1.bf16.msra.mxu0 %v557
    %767 = vmatprep.subr.bf16.mxu0 0
    %768 = vmatpush1.bf16.msra.mxu0 %v556
    %769 = vmatprep.subr.bf16.mxu0 0
    %770 = vmatpush1.bf16.msra.mxu0 %v555
    %771 = vmatprep.subr.bf16.mxu0 0
    %772 = vmatpush1.bf16.msra.mxu0 %v554
    %773 = vmatprep.subr.bf16.mxu0 0
    %774 = vmatpush2.bf16.msra.mxu0 %v569
    %775 = vmatprep.subr.bf16.mxu0 0
    %776 = vmatpush2.bf16.msra.mxu0 %v568
    %777 = vmatprep.subr.bf16.mxu0 0
    %778 = vmatpush2.bf16.msra.mxu0 %v567
    %779 = vmatprep.subr.bf16.mxu0 0
    %780 = vmatpush2.bf16.msra.mxu0 %v566
    %781 = vmatprep.subr.bf16.mxu0 0
    %782 = vmatpush2.bf16.msra.mxu0 %v565
    %783 = vmatprep.subr.bf16.mxu0 0
    %784 = vmatpush2.bf16.msra.mxu0 %v564
    %785 = vmatprep.subr.bf16.mxu0 0
    %786 = vmatpush2.bf16.msra.mxu0 %v563
    %787 = vmatprep.subr.bf16.mxu0 0
    %788 = vmatpush2.bf16.msra.mxu0 %v562
    %789 = vmatprep.mubr.bf16.mxu0 %v114
    %790 = vmatmul.mubr.bf16.gmra.mxu0 %v113
    %v791 = vpop.f32.mrf.mxu0
    %v792 = vadd.f32 %v751, %v791
    %v793 = vpop.f32.mrf.mxu0
    %v794 = vpop.f32.mrf.mxu0
    %v795 = vadd.f32 %v754, %v794
    %v796 = vpop.f32.mrf.mxu0
    %797 = vdwg.mxu0
    %v798 = vmax.f32 %v792, 0.0
    %v799 = vmax.f32 %v795, 0.0
    %v800 = vpack.c.bf16 %v799, %v798
    %v801 = vld [vmem:[#allocation7] sm:$0xf]
    %v802 = vld [vmem:[#allocation7 + $0x4] sm:$0xf]
    %v803 = vld [vmem:[#allocation7 + $0x8] sm:$0xf]
    %v804 = vld [vmem:[#allocation7 + $0xc] sm:$0xf]
    %v805 = vld [vmem:[#allocation7 + $0x10] sm:$0xf]
    %v806 = vld [vmem:[#allocation7 + $0x14] sm:$0xf]
    %v807 = vld [vmem:[#allocation7 + $0x18] sm:$0xf]
    %v808 = vld [vmem:[#allocation7 + $0x1c] sm:$0xf]
    %v809 = vld [vmem:[#allocation7 + $0x20] sm:$0xf]
    %v810 = vld [vmem:[#allocation7 + $0x24] sm:$0xf]
    %v811 = vld [vmem:[#allocation7 + $0x28] sm:$0xf]
    %v812 = vld [vmem:[#allocation7 + $0x2c] sm:$0xf]
    %v813 = vld [vmem:[#allocation7 + $0x30] sm:$0xf]
    %v814 = vld [vmem:[#allocation7 + $0x34] sm:$0xf]
    %v815 = vld [vmem:[#allocation7 + $0x38] sm:$0xf]
    %v816 = vld [vmem:[#allocation7 + $0x3c] sm:$0xf]
    %v817 = vlaneseq
    %v818 = vshrl.u32 %v817, 7
    %v819 = vsub.s32 0, %v818
    %v820 = vrot.slane %v116, %v819
    %v837 = vunpack.c.l.b16 %v801
    %v838 = vunpack.c.l.b16 %v802
    %v839 = vunpack.c.l.b16 %v803
    %v840 = vunpack.c.l.b16 %v804
    %v841 = vunpack.c.l.b16 %v805
    %v842 = vunpack.c.l.b16 %v806
    %v843 = vunpack.c.l.b16 %v807
    %v844 = vunpack.c.l.b16 %v808
    %v845 = vunpack.c.l.b16 %v809
    %v846 = vunpack.c.l.b16 %v810
    %v847 = vunpack.c.l.b16 %v811
    %v848 = vunpack.c.l.b16 %v812
    %v849 = vunpack.c.l.b16 %v813
    %v850 = vunpack.c.l.b16 %v814
    %v851 = vunpack.c.l.b16 %v815
    %v852 = vunpack.c.l.b16 %v816
    %v853 = vpack.c.b16 %v838, %v837
    %v854 = vpack.c.b16 %v840, %v839
    %v855 = vpack.c.b16 %v842, %v841
    %v856 = vpack.c.b16 %v844, %v843
    %v857 = vpack.c.b16 %v846, %v845
    %v858 = vpack.c.b16 %v848, %v847
    %v859 = vpack.c.b16 %v850, %v849
    %v860 = vpack.c.b16 %v852, %v851
    %869 = vmatprep.subr.bf16.mxu0 0
    %870 = vmatpush1.bf16.msra.mxu0 %v860
    %871 = vmatprep.subr.bf16.mxu0 0
    %872 = vmatpush1.bf16.msra.mxu0 %v859
    %873 = vmatprep.subr.bf16.mxu0 0
    %874 = vmatpush1.bf16.msra.mxu0 %v858
    %875 = vmatprep.subr.bf16.mxu0 0
    %876 = vmatpush1.bf16.msra.mxu0 %v857
    %877 = vmatprep.subr.bf16.mxu0 0
    %878 = vmatpush1.bf16.msra.mxu0 %v856
    %879 = vmatprep.subr.bf16.mxu0 0
    %880 = vmatpush1.bf16.msra.mxu0 %v855
    %881 = vmatprep.subr.bf16.mxu0 0
    %882 = vmatpush1.bf16.msra.mxu0 %v854
    %883 = vmatprep.subr.bf16.mxu0 0
    %884 = vmatpush1.bf16.msra.mxu0 %v853
    %885 = vmatprep.subr.bf16.mxu0 0
    %886 = vmatpush2.bf16.msra.mxu0 0
    %887 = vmatprep.subr.bf16.mxu0 0
    %888 = vmatpush2.bf16.msra.mxu0 0
    %889 = vmatprep.subr.bf16.mxu0 0
    %890 = vmatpush2.bf16.msra.mxu0 0
    %891 = vmatprep.subr.bf16.mxu0 0
    %892 = vmatpush2.bf16.msra.mxu0 0
    %893 = vmatprep.subr.bf16.mxu0 0
    %894 = vmatpush2.bf16.msra.mxu0 0
    %895 = vmatprep.subr.bf16.mxu0 0
    %896 = vmatpush2.bf16.msra.mxu0 0
    %897 = vmatprep.subr.bf16.mxu0 0
    %898 = vmatpush2.bf16.msra.mxu0 0
    %899 = vmatprep.subr.bf16.mxu0 0
    %900 = vmatpush2.bf16.msra.mxu0 0
    %901 = vmatprep.mubr.bf16.mxu0 0
    %902 = vmatmul.mubr.bf16.gmra.mxu0 %v800
    %v903 = vpop.f32.mrf.mxu0
    %v904 = vadd.f32 %v820, %v903
    %v905 = vpop.f32.mrf.mxu0
    %v906 = vpop.f32.mrf.mxu0
    %v907 = vadd.f32 %v820, %v906
    %v908 = vpop.f32.mrf.mxu0
    %909 = vdwg.mxu0
    %v910 = vmax.f32 %v904, 0.0
    %v911 = vmax.f32 %v907, 0.0
    %v912 = vpack.c.bf16 %v911, %v910
    %v913 = vld [vmem:[#allocation8] sm:$0xff]
    %v914 = vld [vmem:[#allocation8 + $0x8] sm:$0xff]
    %v915 = vld [vmem:[#allocation8 + $0x10] sm:$0xff]
    %v916 = vld [vmem:[#allocation8 + $0x18] sm:$0xff]
    %v917 = vld [vmem:[#allocation8 + $0x20] sm:$0xff]
    %v918 = vld [vmem:[#allocation8 + $0x28] sm:$0xff]
    %v919 = vld [vmem:[#allocation8 + $0x30] sm:$0xff]
    %v920 = vld [vmem:[#allocation8 + $0x38] sm:$0xff]
    %v921 = vld [vmem:[#allocation8 + $0x40] sm:$0xff]
    %v922 = vld [vmem:[#allocation8 + $0x48] sm:$0xff]
    %v923 = vld [vmem:[#allocation8 + $0x50] sm:$0xff]
    %v924 = vld [vmem:[#allocation8 + $0x58] sm:$0xff]
    %v925 = vld [vmem:[#allocation8 + $0x60] sm:$0xff]
    %v926 = vld [vmem:[#allocation8 + $0x68] sm:$0xff]
    %v927 = vld [vmem:[#allocation8 + $0x70] sm:$0xff]
    %v928 = vld [vmem:[#allocation8 + $0x78] sm:$0xff]
    %v929 = vld [vmem:[#allocation8 + $0x80] sm:$0xff]
    %v930 = vld [vmem:[#allocation8 + $0x88] sm:$0xff]
    %v931 = vld [vmem:[#allocation8 + $0x90] sm:$0xff]
    %v932 = vld [vmem:[#allocation8 + $0x98] sm:$0xff]
    %v933 = vld [vmem:[#allocation8 + $0xa0] sm:$0xff]
    %v934 = vld [vmem:[#allocation8 + $0xa8] sm:$0xff]
    %v935 = vld [vmem:[#allocation8 + $0xb0] sm:$0xff]
    %v936 = vld [vmem:[#allocation8 + $0xb8] sm:$0xff]
    %v937 = vld [vmem:[#allocation8 + $0xc0] sm:$0xff]
    %v938 = vld [vmem:[#allocation8 + $0xc8] sm:$0xff]
    %v939 = vld [vmem:[#allocation8 + $0xd0] sm:$0xff]
    %v940 = vld [vmem:[#allocation8 + $0xd8] sm:$0xff]
    %v941 = vld [vmem:[#allocation8 + $0xe0] sm:$0xff]
    %v942 = vld [vmem:[#allocation8 + $0xe8] sm:$0xff]
    %v943 = vld [vmem:[#allocation8 + $0xf0] sm:$0xff]
    %v944 = vld [vmem:[#allocation8 + $0xf8] sm:$0xff]
    %v945 = vld [vmem:[#allocation8 + $0x100] sm:$0xff]
    %v946 = vld [vmem:[#allocation8 + $0x108] sm:$0xff]
    %v947 = vld [vmem:[#allocation8 + $0x110] sm:$0xff]
    %v948 = vld [vmem:[#allocation8 + $0x118] sm:$0xff]
    %v949 = vld [vmem:[#allocation8 + $0x120] sm:$0xff]
    %v950 = vld [vmem:[#allocation8 + $0x128] sm:$0xff]
    %v951 = vld [vmem:[#allocation8 + $0x130] sm:$0xff]
    %v952 = vld [vmem:[#allocation8 + $0x138] sm:$0xff]
    %v953 = vld [vmem:[#allocation8 + $0x140] sm:$0xff]
    %v954 = vld [vmem:[#allocation8 + $0x148] sm:$0xff]
    %v955 = vld [vmem:[#allocation8 + $0x150] sm:$0xff]
    %v956 = vld [vmem:[#allocation8 + $0x158] sm:$0xff]
    %v957 = vld [vmem:[#allocation8 + $0x160] sm:$0xff]
    %v958 = vld [vmem:[#allocation8 + $0x168] sm:$0xff]
    %v959 = vld [vmem:[#allocation8 + $0x170] sm:$0xff]
    %v960 = vld [vmem:[#allocation8 + $0x178] sm:$0xff]
    %v961 = vld [vmem:[#allocation8 + $0x180] sm:$0xff]
    %v962 = vld [vmem:[#allocation8 + $0x188] sm:$0xff]
    %v963 = vld [vmem:[#allocation8 + $0x190] sm:$0xff]
    %v964 = vld [vmem:[#allocation8 + $0x198] sm:$0xff]
    %v965 = vld [vmem:[#allocation8 + $0x1a0] sm:$0xff]
    %v966 = vld [vmem:[#allocation8 + $0x1a8] sm:$0xff]
    %v967 = vld [vmem:[#allocation8 + $0x1b0] sm:$0xff]
    %v968 = vld [vmem:[#allocation8 + $0x1b8] sm:$0xff]
    %v969 = vld [vmem:[#allocation8 + $0x1c0] sm:$0xff]
    %v970 = vld [vmem:[#allocation8 + $0x1c8] sm:$0xff]
    %v971 = vld [vmem:[#allocation8 + $0x1d0] sm:$0xff]
    %v972 = vld [vmem:[#allocation8 + $0x1d8] sm:$0xff]
    %v973 = vld [vmem:[#allocation8 + $0x1e0] sm:$0xff]
    %v974 = vld [vmem:[#allocation8 + $0x1e8] sm:$0xff]
    %v975 = vld [vmem:[#allocation8 + $0x1f0] sm:$0xff]
    %v976 = vld [vmem:[#allocation8 + $0x1f8] sm:$0xff]
    %v978 = vlaneseq
    %v979 = vshrl.u32 %v978, 7
    %v980 = vsub.s32 0, %v979
    %v981 = vrot.slane %v117, %v980
    %v982 = vlaneseq
    %v983 = vshrl.u32 %v982, 7
    %v984 = vsub.s32 1, %v983
    %v985 = vrot.slane %v117, %v984
    %v986 = vlaneseq
    %v987 = vshrl.u32 %v986, 7
    %v988 = vsub.s32 2, %v987
    %v989 = vrot.slane %v117, %v988
    %v990 = vlaneseq
    %v991 = vshrl.u32 %v990, 7
    %v992 = vsub.s32 3, %v991
    %v993 = vrot.slane %v117, %v992
    %v994 = vlaneseq
    %v995 = vshrl.u32 %v994, 7
    %v996 = vsub.s32 4, %v995
    %v997 = vrot.slane %v117, %v996
    %v998 = vlaneseq
    %v999 = vshrl.u32 %v998, 7
    %v1000 = vsub.s32 5, %v999
    %v1001 = vrot.slane %v117, %v1000
    %v1002 = vlaneseq
    %v1003 = vshrl.u32 %v1002, 7
    %v1004 = vsub.s32 6, %v1003
    %v1005 = vrot.slane %v117, %v1004
    %v1006 = vlaneseq
    %v1007 = vshrl.u32 %v1006, 7
    %v1008 = vsub.s32 7, %v1007
    %v1009 = vrot.slane %v117, %v1008
    %v1082 = vunpack.c.l.b16 %v913
    %v1083 = vunpack.c.h.b16 %v913
    %v1084 = vunpack.c.l.b16 %v914
    %v1085 = vunpack.c.h.b16 %v914
    %v1086 = vunpack.c.l.b16 %v915
    %v1087 = vunpack.c.h.b16 %v915
    %v1088 = vunpack.c.l.b16 %v916
    %v1089 = vunpack.c.h.b16 %v916
    %v1090 = vunpack.c.l.b16 %v917
    %v1091 = vunpack.c.h.b16 %v917
    %v1092 = vunpack.c.l.b16 %v918
    %v1093 = vunpack.c.h.b16 %v918
    %v1094 = vunpack.c.l.b16 %v919
    %v1095 = vunpack.c.h.b16 %v919
    %v1096 = vunpack.c.l.b16 %v920
    %v1097 = vunpack.c.h.b16 %v920
    %v1098 = vunpack.c.l.b16 %v921
    %v1099 = vunpack.c.h.b16 %v921
    %v1100 = vunpack.c.l.b16 %v922
    %v1101 = vunpack.c.h.b16 %v922
    %v1102 = vunpack.c.l.b16 %v923
    %v1103 = vunpack.c.h.b16 %v923
    %v1104 = vunpack.c.l.b16 %v924
    %v1105 = vunpack.c.h.b16 %v924
    %v1106 = vunpack.c.l.b16 %v925
    %v1107 = vunpack.c.h.b16 %v925
    %v1108 = vunpack.c.l.b16 %v926
    %v1109 = vunpack.c.h.b16 %v926
    %v1110 = vunpack.c.l.b16 %v927
    %v1111 = vunpack.c.h.b16 %v927
    %v1112 = vunpack.c.l.b16 %v928
    %v1113 = vunpack.c.h.b16 %v928
    %v1114 = vunpack.c.l.b16 %v929
    %v1115 = vunpack.c.h.b16 %v929
    %v1116 = vunpack.c.l.b16 %v930
    %v1117 = vunpack.c.h.b16 %v930
    %v1118 = vunpack.c.l.b16 %v931
    %v1119 = vunpack.c.h.b16 %v931
    %v1120 = vunpack.c.l.b16 %v932
    %v1121 = vunpack.c.h.b16 %v932
    %v1122 = vunpack.c.l.b16 %v933
    %v1123 = vunpack.c.h.b16 %v933
    %v1124 = vunpack.c.l.b16 %v934
    %v1125 = vunpack.c.h.b16 %v934
    %v1126 = vunpack.c.l.b16 %v935
    %v1127 = vunpack.c.h.b16 %v935
    %v1128 = vunpack.c.l.b16 %v936
    %v1129 = vunpack.c.h.b16 %v936
    %v1130 = vunpack.c.l.b16 %v937
    %v1131 = vunpack.c.h.b16 %v937
    %v1132 = vunpack.c.l.b16 %v938
    %v1133 = vunpack.c.h.b16 %v938
    %v1134 = vunpack.c.l.b16 %v939
    %v1135 = vunpack.c.h.b16 %v939
    %v1136 = vunpack.c.l.b16 %v940
    %v1137 = vunpack.c.h.b16 %v940
    %v1138 = vunpack.c.l.b16 %v941
    %v1139 = vunpack.c.h.b16 %v941
    %v1140 = vunpack.c.l.b16 %v942
    %v1141 = vunpack.c.h.b16 %v942
    %v1142 = vunpack.c.l.b16 %v943
    %v1143 = vunpack.c.h.b16 %v943
    %v1144 = vunpack.c.l.b16 %v944
    %v1145 = vunpack.c.h.b16 %v944
    %v1146 = vunpack.c.l.b16 %v945
    %v1147 = vunpack.c.h.b16 %v945
    %v1148 = vunpack.c.l.b16 %v946
    %v1149 = vunpack.c.h.b16 %v946
    %v1150 = vunpack.c.l.b16 %v947
    %v1151 = vunpack.c.h.b16 %v947
    %v1152 = vunpack.c.l.b16 %v948
    %v1153 = vunpack.c.h.b16 %v948
    %v1154 = vunpack.c.l.b16 %v949
    %v1155 = vunpack.c.h.b16 %v949
    %v1156 = vunpack.c.l.b16 %v950
    %v1157 = vunpack.c.h.b16 %v950
    %v1158 = vunpack.c.l.b16 %v951
    %v1159 = vunpack.c.h.b16 %v951
    %v1160 = vunpack.c.l.b16 %v952
    %v1161 = vunpack.c.h.b16 %v952
    %v1162 = vunpack.c.l.b16 %v953
    %v1163 = vunpack.c.h.b16 %v953
    %v1164 = vunpack.c.l.b16 %v954
    %v1165 = vunpack.c.h.b16 %v954
    %v1166 = vunpack.c.l.b16 %v955
    %v1167 = vunpack.c.h.b16 %v955
    %v1168 = vunpack.c.l.b16 %v956
    %v1169 = vunpack.c.h.b16 %v956
    %v1170 = vunpack.c.l.b16 %v957
    %v1171 = vunpack.c.h.b16 %v957
    %v1172 = vunpack.c.l.b16 %v958
    %v1173 = vunpack.c.h.b16 %v958
    %v1174 = vunpack.c.l.b16 %v959
    %v1175 = vunpack.c.h.b16 %v959
    %v1176 = vunpack.c.l.b16 %v960
    %v1177 = vunpack.c.h.b16 %v960
    %v1178 = vunpack.c.l.b16 %v961
    %v1179 = vunpack.c.h.b16 %v961
    %v1180 = vunpack.c.l.b16 %v962
    %v1181 = vunpack.c.h.b16 %v962
    %v1182 = vunpack.c.l.b16 %v963
    %v1183 = vunpack.c.h.b16 %v963
    %v1184 = vunpack.c.l.b16 %v964
    %v1185 = vunpack.c.h.b16 %v964
    %v1186 = vunpack.c.l.b16 %v965
    %v1187 = vunpack.c.h.b16 %v965
    %v1188 = vunpack.c.l.b16 %v966
    %v1189 = vunpack.c.h.b16 %v966
    %v1190 = vunpack.c.l.b16 %v967
    %v1191 = vunpack.c.h.b16 %v967
    %v1192 = vunpack.c.l.b16 %v968
    %v1193 = vunpack.c.h.b16 %v968
    %v1194 = vunpack.c.l.b16 %v969
    %v1195 = vunpack.c.h.b16 %v969
    %v1196 = vunpack.c.l.b16 %v970
    %v1197 = vunpack.c.h.b16 %v970
    %v1198 = vunpack.c.l.b16 %v971
    %v1199 = vunpack.c.h.b16 %v971
    %v1200 = vunpack.c.l.b16 %v972
    %v1201 = vunpack.c.h.b16 %v972
    %v1202 = vunpack.c.l.b16 %v973
    %v1203 = vunpack.c.h.b16 %v973
    %v1204 = vunpack.c.l.b16 %v974
    %v1205 = vunpack.c.h.b16 %v974
    %v1206 = vunpack.c.l.b16 %v975
    %v1207 = vunpack.c.h.b16 %v975
    %v1208 = vunpack.c.l.b16 %v976
    %v1209 = vunpack.c.h.b16 %v976
    %v1210 = vpack.c.b16 %v1090, %v1082
    %v1211 = vpack.c.b16 %v1091, %v1083
    %v1212 = vpack.c.b16 %v1092, %v1084
    %v1213 = vpack.c.b16 %v1093, %v1085
    %v1214 = vpack.c.b16 %v1094, %v1086
    %v1215 = vpack.c.b16 %v1095, %v1087
    %v1216 = vpack.c.b16 %v1096, %v1088
    %v1217 = vpack.c.b16 %v1097, %v1089
    %v1218 = vpack.c.b16 %v1106, %v1098
    %v1219 = vpack.c.b16 %v1107, %v1099
    %v1220 = vpack.c.b16 %v1108, %v1100
    %v1221 = vpack.c.b16 %v1109, %v1101
    %v1222 = vpack.c.b16 %v1110, %v1102
    %v1223 = vpack.c.b16 %v1111, %v1103
    %v1224 = vpack.c.b16 %v1112, %v1104
    %v1225 = vpack.c.b16 %v1113, %v1105
    %v1226 = vpack.c.b16 %v1122, %v1114
    %v1227 = vpack.c.b16 %v1123, %v1115
    %v1228 = vpack.c.b16 %v1124, %v1116
    %v1229 = vpack.c.b16 %v1125, %v1117
    %v1230 = vpack.c.b16 %v1126, %v1118
    %v1231 = vpack.c.b16 %v1127, %v1119
    %v1232 = vpack.c.b16 %v1128, %v1120
    %v1233 = vpack.c.b16 %v1129, %v1121
    %v1234 = vpack.c.b16 %v1138, %v1130
    %v1235 = vpack.c.b16 %v1139, %v1131
    %v1236 = vpack.c.b16 %v1140, %v1132
    %v1237 = vpack.c.b16 %v1141, %v1133
    %v1238 = vpack.c.b16 %v1142, %v1134
    %v1239 = vpack.c.b16 %v1143, %v1135
    %v1240 = vpack.c.b16 %v1144, %v1136
    %v1241 = vpack.c.b16 %v1145, %v1137
    %v1242 = vpack.c.b16 %v1154, %v1146
    %v1243 = vpack.c.b16 %v1155, %v1147
    %v1244 = vpack.c.b16 %v1156, %v1148
    %v1245 = vpack.c.b16 %v1157, %v1149
    %v1246 = vpack.c.b16 %v1158, %v1150
    %v1247 = vpack.c.b16 %v1159, %v1151
    %v1248 = vpack.c.b16 %v1160, %v1152
    %v1249 = vpack.c.b16 %v1161, %v1153
    %v1250 = vpack.c.b16 %v1170, %v1162
    %v1251 = vpack.c.b16 %v1171, %v1163
    %v1252 = vpack.c.b16 %v1172, %v1164
    %v1253 = vpack.c.b16 %v1173, %v1165
    %v1254 = vpack.c.b16 %v1174, %v1166
    %v1255 = vpack.c.b16 %v1175, %v1167
    %v1256 = vpack.c.b16 %v1176, %v1168
    %v1257 = vpack.c.b16 %v1177, %v1169
    %v1258 = vpack.c.b16 %v1186, %v1178
    %v1259 = vpack.c.b16 %v1187, %v1179
    %v1260 = vpack.c.b16 %v1188, %v1180
    %v1261 = vpack.c.b16 %v1189, %v1181
    %v1262 = vpack.c.b16 %v1190, %v1182
    %v1263 = vpack.c.b16 %v1191, %v1183
    %v1264 = vpack.c.b16 %v1192, %v1184
    %v1265 = vpack.c.b16 %v1193, %v1185
    %v1266 = vpack.c.b16 %v1202, %v1194
    %v1267 = vpack.c.b16 %v1203, %v1195
    %v1268 = vpack.c.b16 %v1204, %v1196
    %v1269 = vpack.c.b16 %v1205, %v1197
    %v1270 = vpack.c.b16 %v1206, %v1198
    %v1271 = vpack.c.b16 %v1207, %v1199
    %v1272 = vpack.c.b16 %v1208, %v1200
    %v1273 = vpack.c.b16 %v1209, %v1201
    %1338 = vmatprep.subr.bf16.mxu0 %v1267
    %1339 = vmatpush1.bf16.msra.mxu0 %v1266
    %1340 = vmatprep.subr.bf16.mxu0 %v1259
    %1341 = vmatpush1.bf16.msra.mxu0 %v1258
    %1342 = vmatprep.subr.bf16.mxu0 %v1251
    %1343 = vmatpush1.bf16.msra.mxu0 %v1250
    %1344 = vmatprep.subr.bf16.mxu0 %v1243
    %1345 = vmatpush1.bf16.msra.mxu0 %v1242
    %1346 = vmatprep.subr.bf16.mxu0 %v1235
    %1347 = vmatpush1.bf16.msra.mxu0 %v1234
    %1348 = vmatprep.subr.bf16.mxu0 %v1227
    %1349 = vmatpush1.bf16.msra.mxu0 %v1226
    %1350 = vmatprep.subr.bf16.mxu0 %v1219
    %1351 = vmatpush1.bf16.msra.mxu0 %v1218
    %1352 = vmatprep.subr.bf16.mxu0 %v1211
    %1353 = vmatpush1.bf16.msra.mxu0 %v1210
    %1354 = vmatprep.subr.bf16.mxu0 0
    %1355 = vmatpush2.bf16.msra.mxu0 0
    %1356 = vmatprep.subr.bf16.mxu0 0
    %1357 = vmatpush2.bf16.msra.mxu0 0
    %1358 = vmatprep.subr.bf16.mxu0 0
    %1359 = vmatpush2.bf16.msra.mxu0 0
    %1360 = vmatprep.subr.bf16.mxu0 0
    %1361 = vmatpush2.bf16.msra.mxu0 0
    %1362 = vmatprep.subr.bf16.mxu0 0
    %1363 = vmatpush2.bf16.msra.mxu0 0
    %1364 = vmatprep.subr.bf16.mxu0 0
    %1365 = vmatpush2.bf16.msra.mxu0 0
    %1366 = vmatprep.subr.bf16.mxu0 0
    %1367 = vmatpush2.bf16.msra.mxu0 0
    %1368 = vmatprep.subr.bf16.mxu0 0
    %1369 = vmatpush2.bf16.msra.mxu0 0
    %1370 = vmatprep.mubr.bf16.mxu0 0
    %1371 = vmatmul.mubr.bf16.gmra.mxu0 %v912
    %v1372 = vpop.f32.mrf.mxu0
    %v1373 = vadd.f32 %v981, %v1372
    %v1374 = vpop.f32.mrf.mxu0
    %v1375 = vadd.f32 %v985, %v1374
    %v1376 = vpop.f32.mrf.mxu0
    %v1377 = vadd.f32 %v981, %v1376
    %v1378 = vpop.f32.mrf.mxu0
    %v1379 = vadd.f32 %v985, %v1378
    %1380 = vdwg.mxu0
    %1381 = vmatprep.subr.bf16.mxu0 %v1269
    %1382 = vmatpush1.bf16.msra.mxu0 %v1268
    %1383 = vmatprep.subr.bf16.mxu0 %v1261
    %1384 = vmatpush1.bf16.msra.mxu0 %v1260
    %1385 = vmatprep.subr.bf16.mxu0 %v1253
    %1386 = vmatpush1.bf16.msra.mxu0 %v1252
    %1387 = vmatprep.subr.bf16.mxu0 %v1245
    %1388 = vmatpush1.bf16.msra.mxu0 %v1244
    %1389 = vmatprep.subr.bf16.mxu0 %v1237
    %1390 = vmatpush1.bf16.msra.mxu0 %v1236
    %1391 = vmatprep.subr.bf16.mxu0 %v1229
    %1392 = vmatpush1.bf16.msra.mxu0 %v1228
    %1393 = vmatprep.subr.bf16.mxu0 %v1221
    %1394 = vmatpush1.bf16.msra.mxu0 %v1220
    %1395 = vmatprep.subr.bf16.mxu0 %v1213
    %1396 = vmatpush1.bf16.msra.mxu0 %v1212
    %1397 = vmatprep.subr.bf16.mxu0 0
    %1398 = vmatpush2.bf16.msra.mxu0 0
    %1399 = vmatprep.subr.bf16.mxu0 0
    %1400 = vmatpush2.bf16.msra.mxu0 0
    %1401 = vmatprep.subr.bf16.mxu0 0
    %1402 = vmatpush2.bf16.msra.mxu0 0
    %1403 = vmatprep.subr.bf16.mxu0 0
    %1404 = vmatpush2.bf16.msra.mxu0 0
    %1405 = vmatprep.subr.bf16.mxu0 0
    %1406 = vmatpush2.bf16.msra.mxu0 0
    %1407 = vmatprep.subr.bf16.mxu0 0
    %1408 = vmatpush2.bf16.msra.mxu0 0
    %1409 = vmatprep.subr.bf16.mxu0 0
    %1410 = vmatpush2.bf16.msra.mxu0 0
    %1411 = vmatprep.subr.bf16.mxu0 0
    %1412 = vmatpush2.bf16.msra.mxu0 0
    %1413 = vmatprep.mubr.bf16.mxu0 0
    %1414 = vmatmul.mubr.bf16.gmra.mxu0 %v912
    %v1415 = vpop.f32.mrf.mxu0
    %v1416 = vadd.f32 %v989, %v1415
    %v1417 = vpop.f32.mrf.mxu0
    %v1418 = vadd.f32 %v993, %v1417
    %v1419 = vpop.f32.mrf.mxu0
    %v1420 = vadd.f32 %v989, %v1419
    %v1421 = vpop.f32.mrf.mxu0
    %v1422 = vadd.f32 %v993, %v1421
    %1423 = vdwg.mxu0
    %1424 = vmatprep.subr.bf16.mxu0 %v1271
    %1425 = vmatpush1.bf16.msra.mxu0 %v1270
    %1426 = vmatprep.subr.bf16.mxu0 %v1263
    %1427 = vmatpush1.bf16.msra.mxu0 %v1262
    %1428 = vmatprep.subr.bf16.mxu0 %v1255
    %1429 = vmatpush1.bf16.msra.mxu0 %v1254
    %1430 = vmatprep.subr.bf16.mxu0 %v1247
    %1431 = vmatpush1.bf16.msra.mxu0 %v1246
    %1432 = vmatprep.subr.bf16.mxu0 %v1239
    %1433 = vmatpush1.bf16.msra.mxu0 %v1238
    %1434 = vmatprep.subr.bf16.mxu0 %v1231
    %1435 = vmatpush1.bf16.msra.mxu0 %v1230
    %1436 = vmatprep.subr.bf16.mxu0 %v1223
    %1437 = vmatpush1.bf16.msra.mxu0 %v1222
    %1438 = vmatprep.subr.bf16.mxu0 %v1215
    %1439 = vmatpush1.bf16.msra.mxu0 %v1214
    %1440 = vmatprep.subr.bf16.mxu0 0
    %1441 = vmatpush2.bf16.msra.mxu0 0
    %1442 = vmatprep.subr.bf16.mxu0 0
    %1443 = vmatpush2.bf16.msra.mxu0 0
    %1444 = vmatprep.subr.bf16.mxu0 0
    %1445 = vmatpush2.bf16.msra.mxu0 0
    %1446 = vmatprep.subr.bf16.mxu0 0
    %1447 = vmatpush2.bf16.msra.mxu0 0
    %1448 = vmatprep.subr.bf16.mxu0 0
    %1449 = vmatpush2.bf16.msra.mxu0 0
    %1450 = vmatprep.subr.bf16.mxu0 0
    %1451 = vmatpush2.bf16.msra.mxu0 0
    %1452 = vmatprep.subr.bf16.mxu0 0
    %1453 = vmatpush2.bf16.msra.mxu0 0
    %1454 = vmatprep.subr.bf16.mxu0 0
    %1455 = vmatpush2.bf16.msra.mxu0 0
    %1456 = vmatprep.mubr.bf16.mxu0 0
    %1457 = vmatmul.mubr.bf16.gmra.mxu0 %v912
    %v1458 = vpop.f32.mrf.mxu0
    %v1459 = vadd.f32 %v997, %v1458
    %v1460 = vpop.f32.mrf.mxu0
    %v1461 = vadd.f32 %v1001, %v1460
    %v1462 = vpop.f32.mrf.mxu0
    %v1463 = vadd.f32 %v997, %v1462
    %v1464 = vpop.f32.mrf.mxu0
    %v1465 = vadd.f32 %v1001, %v1464
    %1466 = vdwg.mxu0
    %1467 = vmatprep.subr.bf16.mxu0 %v1273
    %1468 = vmatpush1.bf16.msra.mxu0 %v1272
    %1469 = vmatprep.subr.bf16.mxu0 %v1265
    %1470 = vmatpush1.bf16.msra.mxu0 %v1264
    %1471 = vmatprep.subr.bf16.mxu0 %v1257
    %1472 = vmatpush1.bf16.msra.mxu0 %v1256
    %1473 = vmatprep.subr.bf16.mxu0 %v1249
    %1474 = vmatpush1.bf16.msra.mxu0 %v1248
    %1475 = vmatprep.subr.bf16.mxu0 %v1241
    %1476 = vmatpush1.bf16.msra.mxu0 %v1240
    %1477 = vmatprep.subr.bf16.mxu0 %v1233
    %1478 = vmatpush1.bf16.msra.mxu0 %v1232
    %1479 = vmatprep.subr.bf16.mxu0 %v1225
    %1480 = vmatpush1.bf16.msra.mxu0 %v1224
    %1481 = vmatprep.subr.bf16.mxu0 %v1217
    %1482 = vmatpush1.bf16.msra.mxu0 %v1216
    %1483 = vmatprep.subr.bf16.mxu0 0
    %1484 = vmatpush2.bf16.msra.mxu0 0
    %1485 = vmatprep.subr.bf16.mxu0 0
    %1486 = vmatpush2.bf16.msra.mxu0 0
    %1487 = vmatprep.subr.bf16.mxu0 0
    %1488 = vmatpush2.bf16.msra.mxu0 0
    %1489 = vmatprep.subr.bf16.mxu0 0
    %1490 = vmatpush2.bf16.msra.mxu0 0
    %1491 = vmatprep.subr.bf16.mxu0 0
    %1492 = vmatpush2.bf16.msra.mxu0 0
    %1493 = vmatprep.subr.bf16.mxu0 0
    %1494 = vmatpush2.bf16.msra.mxu0 0
    %1495 = vmatprep.subr.bf16.mxu0 0
    %1496 = vmatpush2.bf16.msra.mxu0 0
    %1497 = vmatprep.subr.bf16.mxu0 0
    %1498 = vmatpush2.bf16.msra.mxu0 0
    %1499 = vmatprep.mubr.bf16.mxu0 0
    %1500 = vmatmul.mubr.bf16.gmra.mxu0 %v912
    %v1501 = vpop.f32.mrf.mxu0
    %v1502 = vadd.f32 %v1005, %v1501
    %v1503 = vpop.f32.mrf.mxu0
    %v1504 = vadd.f32 %v1009, %v1503
    %v1505 = vpop.f32.mrf.mxu0
    %v1506 = vadd.f32 %v1005, %v1505
    %v1507 = vpop.f32.mrf.mxu0
    %v1508 = vadd.f32 %v1009, %v1507
    %1509 = vdwg.mxu0
    %v1510 = vpack.c.bf16 %v1377, %v1373
    %v1511 = vpack.c.bf16 %v1379, %v1375
    %v1512 = vpack.c.bf16 %v1420, %v1416
    %v1513 = vpack.c.bf16 %v1422, %v1418
    %v1514 = vpack.c.bf16 %v1463, %v1459
    %v1515 = vpack.c.bf16 %v1465, %v1461
    %v1516 = vpack.c.bf16 %v1506, %v1502
    %v1517 = vpack.c.bf16 %v1508, %v1504
    %v1526 = vunpack.c.l.b16 %v1510
    %v1527 = vunpack.c.l.b16 %v1511
    %v1528 = vunpack.c.l.b16 %v1512
    %v1529 = vunpack.c.l.b16 %v1513
    %v1530 = vunpack.c.l.b16 %v1514
    %v1531 = vunpack.c.l.b16 %v1515
    %v1532 = vunpack.c.l.b16 %v1516
    %v1533 = vunpack.c.l.b16 %v1517
    %v1534 = vunpack.c.h.b16 %v1510
    %v1535 = vunpack.c.h.b16 %v1511
    %v1536 = vunpack.c.h.b16 %v1512
    %v1537 = vunpack.c.h.b16 %v1513
    %v1538 = vunpack.c.h.b16 %v1514
    %v1539 = vunpack.c.h.b16 %v1515
    %v1540 = vunpack.c.h.b16 %v1516
    %v1541 = vunpack.c.h.b16 %v1517
    %v1542 = vpack.c.b16 %v1527, %v1526
    %v1543 = vpack.c.b16 %v1529, %v1528
    %v1544 = vpack.c.b16 %v1531, %v1530
    %v1545 = vpack.c.b16 %v1533, %v1532
    %v1546 = vpack.c.b16 %v1535, %v1534
    %v1547 = vpack.c.b16 %v1537, %v1536
    %v1548 = vpack.c.b16 %v1539, %v1538
    %v1549 = vpack.c.b16 %v1541, %v1540
    %1558 = vst [vmem:[#allocation11] sm:$0xff] %v1542
    %1559 = vst [vmem:[#allocation11 + $0x8] sm:$0xff] %v1543
    %1560 = vst [vmem:[#allocation11 + $0x10] sm:$0xff] %v1544
    %1561 = vst [vmem:[#allocation11 + $0x18] sm:$0xff] %v1545
    %1562 = vst [vmem:[#allocation11 + $0x20] sm:$0xff] %v1546
    %1563 = vst [vmem:[#allocation11 + $0x28] sm:$0xff] %v1547
    %1564 = vst [vmem:[#allocation11 + $0x30] sm:$0xff] %v1548
    %1565 = vst [vmem:[#allocation11 + $0x38] sm:$0xff] %v1549
    // Predicated region
    $region46: #{tpu_custom_call.1} parent=1 // pred_check
      _
    $region47: #{tpu_custom_call.1} parent=1 // pred_check_branch
      %1567 = sbr.rel (0) target = $region49
    $region48: #{tpu_custom_call.1} parent=1 // pred_region
      %s1569 = ssub.s32 1024, 1024
      %1570 = vsyncadd [#allocation4], %s1569
      %s1571 = sshll.u32 [#allocation11], 4
      %s1572 = int_to_ptr.vmem [resolvable:$true] %s1571
      %1577 = dma.vmem_to_hbm [thread:$0]  %s1572, 1024, %s6, [#allocation4], 512, 512, 32
    $region49: #{tpu_custom_call.1} parent=1 // pred_fallthru
      _
    // Predicated region
    $region50: #{tpu_custom_call.1} parent=1 // pred_check
      _
    $region51: #{tpu_custom_call.1} parent=1 // pred_check_branch
      %1579 = sbr.rel (0) target = $region53
    $region52: #{tpu_custom_call.1} parent=1 // pred_region
      %1580 = dma.done [#allocation4], 1024
    $region53: #{tpu_custom_call.1} parent=1 // pred_fallthru
      _
    %1581 = vsyncpa [#allocation3], 1
    %1582 = vsyncpa [#allocation6], 1
    %1583 = vsyncpa [#allocation9], 1
    %1584 = vsyncpa [#allocation4], 1

</llo_original>
